<compile_context>
chip_gen: v5e
topology: v5e:2x2
jax: 0.10.0
libtpu: 0.0.40
codegen_flags: <defaults>
</compile_context>

<pallas_src>
import jax
import jax.numpy as jnp
from jax.experimental import pallas as pl
from jax.experimental.pallas import tpu as pltpu


def se_kernel(x_ref, w1t_ref, s1_ref, b1_ref, w2t_ref, s2_ref, b2_ref, o_ref):
    x = x_ref[...]                                   # (Nb, C, HW), I/O dtype
    xf = x.astype(jnp.float32)

    # nn.AdaptiveAvgPool2d(1): global average pool over the flattened spatial axis.
    # f32 accumulator (safe for bf16 inputs), lane-axis reduce.
    inv_hw = 1.0 / x.shape[-1]
    pooled = jnp.sum(xf, axis=-1) * inv_hw           # (Nb, C)

    # 1x1 conv C -> C//r (no bias): all Nb pooled rows at once, channels on lanes.
    h = jnp.dot(pooled, w1t_ref[...], preferred_element_type=jnp.float32)   # (Nb, Cr)
    # Folded BatchNorm + ReLU (row-vector scale/shift broadcast over Nb).
    h = jnp.maximum(h * s1_ref[...] + b1_ref[...], 0.0)

    # 1x1 conv C//r -> C (no bias).
    g = jnp.dot(h, w2t_ref[...], preferred_element_type=jnp.float32)        # (Nb, C)
    # Folded BatchNorm.
    g = g * s2_ref[...] + b2_ref[...]

    # hsigmoid: relu6(x + 3) / 6
    gate = jnp.clip(g + 3.0, 0.0, 6.0) * (1.0 / 6.0)                        # (Nb, C)

    # x * se(x): per-channel gate broadcast along the lane (spatial) axis.
    o_ref[...] = (xf * gate[:, :, None]).astype(o_ref.dtype)


def _pick_batch_block(N, C, HW, itemsize, target_bytes=4 << 20):
    """Largest Nb dividing N with block size <= target_bytes (at least 1)."""
    per_img = max(C * HW * itemsize, 1)
    nb = max(1, min(N, target_bytes // per_img))
    while N % nb:
        nb -= 1
    return nb


def se_module(x, w1, s1, b1, w2, s2, b2):
    """x: (N, C, H, W).  w1: (Cr, C), w2: (C, Cr).  s*/b*: folded-BN scale/shift (K,)."""
    N, C, H, W = x.shape
    Cr = w1.shape[0]
    HW = H * W

    # Flatten spatial dims so H*W is the lane axis (lane-dense DMA in and out).
    x_flat = x.reshape(N, C, HW)

    # Pre-transpose weights so channels stay on lanes; scale/shift as (1, K) rows.
    w1t = jnp.asarray(w1, jnp.float32).T            # (C, Cr)
    w2t = jnp.asarray(w2, jnp.float32).T            # (Cr, C)
    s1r = jnp.asarray(s1, jnp.float32).reshape(1, Cr)
    b1r = jnp.asarray(b1, jnp.float32).reshape(1, Cr)
    s2r = jnp.asarray(s2, jnp.float32).reshape(1, C)
    b2r = jnp.asarray(b2, jnp.float32).reshape(1, C)

    Nb = _pick_batch_block(N, C, HW, x.dtype.itemsize)
    grid = (N // Nb,)

    # VMEM budget: in + out blocks, double-buffered, plus small resident weights.
    block_bytes = Nb * C * HW * x.dtype.itemsize
    vmem_limit = min(max(4 * block_bytes + (1 << 20), 16 << 20), 48 << 20)

    def resident(shape):
        # Weights / scales stay resident across the whole grid (constant index_map).
        return pl.BlockSpec(shape, lambda n: tuple(0 for _ in shape))

    out = pl.pallas_call(
        se_kernel,
        out_shape=jax.ShapeDtypeStruct((N, C, HW), x.dtype),
        grid=grid,
        in_specs=[
            pl.BlockSpec((Nb, C, HW), lambda n: (n, 0, 0)),  # x: Nb images per step
            resident((C, Cr)),                               # w1^T
            resident((1, Cr)), resident((1, Cr)),            # bn1 folded scale/shift
            resident((Cr, C)),                               # w2^T
            resident((1, C)), resident((1, C)),              # bn2 folded scale/shift
        ],
        out_specs=pl.BlockSpec((Nb, C, HW), lambda n: (n, 0, 0)),
        compiler_params=pltpu.CompilerParams(
            dimension_semantics=("parallel",),
            vmem_limit_bytes=vmem_limit,
        ),
    )(x_flat, w1t, s1r, b1r, w2t, s2r, b2r)

    return out.reshape(N, C, H, W)


def se_reference(x, w1, s1, b1, w2, s2, b2):
    """Pure-JAX reference with identical (folded-BN) semantics."""
    xf = x.astype(jnp.float32)
    pooled = jnp.mean(xf, axis=(2, 3))                               # (N, C)
    h = pooled @ w1.T                                                # (N, Cr)
    h = jnp.maximum(h * s1 + b1, 0.0)
    g = h @ w2.T                                                     # (N, C)
    g = g * s2 + b2
    gate = jnp.clip(g + 3.0, 0.0, 6.0) / 6.0
    return (xf * gate[:, :, None, None]).astype(x.dtype)


if __name__ == "__main__":
    key = jax.random.PRNGKey(0)
    N, C, H, W = 2, 8, 16, 16
    reduction = 4
    Cr = C // reduction
    eps = 1e-5

    ks = jax.random.split(key, 10)
    x = jax.random.normal(ks[0], (N, C, H, W), jnp.float32)

    # Conv weights (kernel_size=1, bias=False): (out, in, 1, 1) squeezed to (out, in)
    w1 = jax.random.normal(ks[1], (Cr, C), jnp.float32) * 0.3
    w2 = jax.random.normal(ks[2], (C, Cr), jnp.float32) * 0.3

    # BatchNorm parameters (gamma, beta, running_mean, running_var)
    g1 = 1.0 + 0.1 * jax.random.normal(ks[3], (Cr,), jnp.float32)
    be1 = 0.1 * jax.random.normal(ks[4], (Cr,), jnp.float32)
    m1 = 0.1 * jax.random.normal(ks[5], (Cr,), jnp.float32)
    v1 = 1.0 + 0.1 * jnp.abs(jax.random.normal(ks[6], (Cr,), jnp.float32))

    g2 = 1.0 + 0.1 * jax.random.normal(ks[7], (C,), jnp.float32)
    be2 = 0.1 * jax.random.normal(ks[8], (C,), jnp.float32)
    m2 = 0.1 * jax.random.normal(ks[9], (C,), jnp.float32)
    v2 = 1.0 + 0.1 * jnp.abs(jax.random.normal(ks[0], (C,), jnp.float32))

    # Fold BN into per-channel scale/shift (inference semantics)
    s1 = g1 / jnp.sqrt(v1 + eps)
    b1 = be1 - m1 * s1
    s2 = g2 / jnp.sqrt(v2 + eps)
    b2 = be2 - m2 * s2

    out = se_module(x, w1, s1, b1, w2, s2, b2)
    out = jax.block_until_ready(out)

    ref = se_reference(x, w1, s1, b1, w2, s2, b2)
    if not jnp.allclose(out, ref, atol=1e-5, rtol=1e-5):
        raise AssertionError("Pallas SeModule output does not match JAX reference")

    print("KERNEL_OK")
</pallas_src>

<mosaic_0001>
module attributes {stable_mosaic.version = 11 : i64} {
  func.func @se_kernel(%arg0: i32, %arg1: memref<2x8x256xf32, #tpu.memory_space<vmem>>, %arg2: memref<8x2xf32, #tpu.memory_space<vmem>>, %arg3: memref<1x2xf32, #tpu.memory_space<vmem>>, %arg4: memref<1x2xf32, #tpu.memory_space<vmem>>, %arg5: memref<2x8xf32, #tpu.memory_space<vmem>>, %arg6: memref<1x8xf32, #tpu.memory_space<vmem>>, %arg7: memref<1x8xf32, #tpu.memory_space<vmem>>, %arg8: memref<2x8x256xf32, #tpu.memory_space<vmem>>) attributes {dimension_semantics = [#tpu.dimension_semantics<parallel>], iteration_bounds = array<i64: 1>, scalar_prefetch = 0 : i64, scratch_operands = 0 : i64, tpu.core_type = #tpu.core_type<tc>, window_params = [{transform_indices = @transform_0, window_bounds = array<i64: 2, 8, 256>}, {pipeline_mode = #tpu.pipeline_mode<synchronous>, transform_indices = @transform_1, window_bounds = array<i64: 8, 2>}, {pipeline_mode = #tpu.pipeline_mode<synchronous>, transform_indices = @transform_2, window_bounds = array<i64: 1, 2>}, {pipeline_mode = #tpu.pipeline_mode<synchronous>, transform_indices = @transform_3, window_bounds = array<i64: 1, 2>}, {pipeline_mode = #tpu.pipeline_mode<synchronous>, transform_indices = @transform_4, window_bounds = array<i64: 2, 8>}, {pipeline_mode = #tpu.pipeline_mode<synchronous>, transform_indices = @transform_5, window_bounds = array<i64: 1, 8>}, {pipeline_mode = #tpu.pipeline_mode<synchronous>, transform_indices = @transform_6, window_bounds = array<i64: 1, 8>}, {transform_indices = @transform_7, window_bounds = array<i64: 2, 8, 256>}]} {
    %c0 = arith.constant 0 : index
    %c0_0 = arith.constant 0 : index
    %c0_1 = arith.constant 0 : index
    %0 = vector.load %arg1[%c0, %c0_0, %c0_1] : memref<2x8x256xf32, #tpu.memory_space<vmem>>, vector<2x8x256xf32>
    %cst = arith.constant dense<0.000000e+00> : vector<2x8xf32>
    %1 = vector.multi_reduction <add>, %0, %cst [2] : vector<2x8x256xf32> to vector<2x8xf32>
    %cst_2 = arith.constant 3.906250e-03 : f32
    %2 = vector.broadcast %cst_2 : f32 to vector<2x8xf32>
    %3 = arith.mulf %1, %2 : vector<2x8xf32>
    %c0_3 = arith.constant 0 : index
    %c0_4 = arith.constant 0 : index
    %4 = vector.load %arg2[%c0_3, %c0_4] : memref<8x2xf32, #tpu.memory_space<vmem>>, vector<8x2xf32>
    %cst_5 = arith.constant dense<0.000000e+00> : vector<2x2xf32>
    %5 = tpu.matmul %3, %4, %cst_5 {dimension_numbers = #tpu.dot_dimension_numbers<[1], [0], [0], [1], [0, 0, 1, 1], [], []>} : vector<2x8xf32>, vector<8x2xf32>, vector<2x2xf32> -> vector<2x2xf32>
    %c0_6 = arith.constant 0 : index
    %c0_7 = arith.constant 0 : index
    %6 = vector.load %arg3[%c0_6, %c0_7] : memref<1x2xf32, #tpu.memory_space<vmem>>, vector<1x2xf32>
    %7 = vector.broadcast %6 : vector<1x2xf32> to vector<2x2xf32>
    %8 = arith.mulf %5, %7 : vector<2x2xf32>
    %c0_8 = arith.constant 0 : index
    %c0_9 = arith.constant 0 : index
    %9 = vector.load %arg4[%c0_8, %c0_9] : memref<1x2xf32, #tpu.memory_space<vmem>>, vector<1x2xf32>
    %10 = vector.broadcast %9 : vector<1x2xf32> to vector<2x2xf32>
    %11 = arith.addf %8, %10 : vector<2x2xf32>
    %cst_10 = arith.constant 0.000000e+00 : f32
    %12 = vector.broadcast %cst_10 : f32 to vector<2x2xf32>
    %13 = arith.maximumf %11, %12 : vector<2x2xf32>
    %c0_11 = arith.constant 0 : index
    %c0_12 = arith.constant 0 : index
    %14 = vector.load %arg5[%c0_11, %c0_12] : memref<2x8xf32, #tpu.memory_space<vmem>>, vector<2x8xf32>
    %cst_13 = arith.constant dense<0.000000e+00> : vector<2x8xf32>
    %15 = tpu.matmul %13, %14, %cst_13 {dimension_numbers = #tpu.dot_dimension_numbers<[1], [0], [0], [1], [0, 0, 1, 1], [], []>} : vector<2x2xf32>, vector<2x8xf32>, vector<2x8xf32> -> vector<2x8xf32>
    %c0_14 = arith.constant 0 : index
    %c0_15 = arith.constant 0 : index
    %16 = vector.load %arg6[%c0_14, %c0_15] : memref<1x8xf32, #tpu.memory_space<vmem>>, vector<1x8xf32>
    %17 = vector.broadcast %16 : vector<1x8xf32> to vector<2x8xf32>
    %18 = arith.mulf %15, %17 : vector<2x8xf32>
    %c0_16 = arith.constant 0 : index
    %c0_17 = arith.constant 0 : index
    %19 = vector.load %arg7[%c0_16, %c0_17] : memref<1x8xf32, #tpu.memory_space<vmem>>, vector<1x8xf32>
    %20 = vector.broadcast %19 : vector<1x8xf32> to vector<2x8xf32>
    %21 = arith.addf %18, %20 : vector<2x8xf32>
    %cst_18 = arith.constant 3.000000e+00 : f32
    %22 = vector.broadcast %cst_18 : f32 to vector<2x8xf32>
    %23 = arith.addf %21, %22 : vector<2x8xf32>
    %cst_19 = arith.constant 0.000000e+00 : f32
    %cst_20 = arith.constant 6.000000e+00 : f32
    %24 = vector.broadcast %cst_19 : f32 to vector<2x8xf32>
    %25 = arith.maximumf %24, %23 : vector<2x8xf32>
    %26 = vector.broadcast %cst_20 : f32 to vector<2x8xf32>
    %27 = arith.minimumf %26, %25 : vector<2x8xf32>
    %cst_21 = arith.constant 0.166666672 : f32
    %28 = vector.broadcast %cst_21 : f32 to vector<2x8xf32>
    %29 = arith.mulf %27, %28 : vector<2x8xf32>
    %30 = vector.shape_cast %29 : vector<2x8xf32> to vector<2x8x1xf32>
    %31 = vector.broadcast %30 : vector<2x8x1xf32> to vector<2x8x256xf32>
    %32 = arith.mulf %0, %31 : vector<2x8x256xf32>
    %c0_22 = arith.constant 0 : index
    %c0_23 = arith.constant 0 : index
    %c0_24 = arith.constant 0 : index
    %33 = vector.load %arg8[%c0_22, %c0_23, %c0_24] : memref<2x8x256xf32, #tpu.memory_space<vmem>>, vector<2x8x256xf32>
    tpu.vector_store %arg8[%c0_22, %c0_23, %c0_24], %32 {strides = array<i32>} : memref<2x8x256xf32, #tpu.memory_space<vmem>>, vector<2x8x256xf32>,
    return
  }
  func.func @transform_0(%arg0: i32) -> (i32, i32, i32) {
    %c0_i32 = arith.constant 0 : i32
    %c0_i32_0 = arith.constant 0 : i32
    %c0_i32_1 = arith.constant 0 : i32
    return %arg0, %c0_i32, %c0_i32_0 : i32, i32, i32
  }
  func.func @transform_1(%arg0: i32) -> (i32, i32) {
    %c0_i32 = arith.constant 0 : i32
    %c0_i32_0 = arith.constant 0 : i32
    %c0_i32_1 = arith.constant 0 : i32
    return %c0_i32, %c0_i32_0 : i32, i32
  }
  func.func @transform_2(%arg0: i32) -> (i32, i32) {
    %c0_i32 = arith.constant 0 : i32
    %c0_i32_0 = arith.constant 0 : i32
    %c0_i32_1 = arith.constant 0 : i32
    return %c0_i32, %c0_i32_0 : i32, i32
  }
  func.func @transform_3(%arg0: i32) -> (i32, i32) {
    %c0_i32 = arith.constant 0 : i32
    %c0_i32_0 = arith.constant 0 : i32
    %c0_i32_1 = arith.constant 0 : i32
    return %c0_i32, %c0_i32_0 : i32, i32
  }
  func.func @transform_4(%arg0: i32) -> (i32, i32) {
    %c0_i32 = arith.constant 0 : i32
    %c0_i32_0 = arith.constant 0 : i32
    %c0_i32_1 = arith.constant 0 : i32
    return %c0_i32, %c0_i32_0 : i32, i32
  }
  func.func @transform_5(%arg0: i32) -> (i32, i32) {
    %c0_i32 = arith.constant 0 : i32
    %c0_i32_0 = arith.constant 0 : i32
    %c0_i32_1 = arith.constant 0 : i32
    return %c0_i32, %c0_i32_0 : i32, i32
  }
  func.func @transform_6(%arg0: i32) -> (i32, i32) {
    %c0_i32 = arith.constant 0 : i32
    %c0_i32_0 = arith.constant 0 : i32
    %c0_i32_1 = arith.constant 0 : i32
    return %c0_i32, %c0_i32_0 : i32, i32
  }
  func.func @transform_7(%arg0: i32) -> (i32, i32, i32) {
    %c0_i32 = arith.constant 0 : i32
    %c0_i32_0 = arith.constant 0 : i32
    %c0_i32_1 = arith.constant 0 : i32
    return %arg0, %c0_i32, %c0_i32_0 : i32, i32, i32
  }
}

</mosaic_0001>

<llo_original>
// kernel: tpu_custom_call.1
$region0: #{tpu_custom_call.1}
  #allocation0 [shape = 'u32[]', space=smem, size = 0x4, offset = 0x4, fixed_abs, tag = 'smem constant byte address 0x4 - core index']
  #allocation1 [shape = 'u32[72,128]{1,0:T(1,128)}', space=vmem, size = 0x9000, scoped, tag = 'internal scratch']
  %s0 = inlined_call_operand.hbm [shape: f32[2,8,256], index: 0, kind: input, shape index: {}]
  %s1 = inlined_call_operand.vmem [shape: f32[8,2], index: 1, kind: input, shape index: {}]
  %s2 = inlined_call_operand.vmem [shape: f32[1,2], index: 2, kind: input, shape index: {}]
  %s3 = inlined_call_operand.vmem [shape: f32[1,2], index: 3, kind: input, shape index: {}]
  %s4 = inlined_call_operand.vmem [shape: f32[2,8], index: 4, kind: input, shape index: {}]
  %s5 = inlined_call_operand.vmem [shape: f32[1,8], index: 5, kind: input, shape index: {}]
  %s6 = inlined_call_operand.vmem [shape: f32[1,8], index: 6, kind: input, shape index: {}]
  %s7 = inlined_call_operand.hbm [shape: f32[2,8,256], index: 7, kind: output, shape index: {}]
  %s8 = sld [smem:[#allocation0]]
  $region42: #{tpu_custom_call.1} parent=0
    _
  %s10 = ssub.s32 1, %s8
  %s11 = scalar_select 0, %s10, %s8
  $region1: #{tpu_custom_call.1} parent=0
    #allocation2 [shape = 'u8[16384]{0}', space=vmem, size = 0x4000, scoped, tag = 'input window, operand 0, single buffered']
    #allocation3 [shape = 's32[1]{0}', space=sflag, size = 0x4, scoped, tag = 'scoped memory for tpu_custom_call.1']
    #allocation4 [shape = 's32[1]{0}', space=sflag, size = 0x4, scoped, tag = 'scoped memory for tpu_custom_call.1']
    #allocation5 [shape = 'u8[16384]{0}', space=vmem, size = 0x4000, scoped, tag = 'output window, operand 0, single buffered']
    %12 = vsyncpa [#allocation3], 0
    %13 = vsyncpa [#allocation4], 0
    // Predicated region
    $region2: #{tpu_custom_call.1} parent=1 // pred_check
      _
    $region3: #{tpu_custom_call.1} parent=1 // pred_check_branch
      %15 = sbr.rel (0) target = $region5
    $region4: #{tpu_custom_call.1} parent=1 // pred_region
      %17 = vsyncadd [#allocation3], 0
      %s18 = sshll.u32 %s0, 4
      %s19 = int_to_ptr.hbm [resolvable:$true] %s18
      %s20 = sshll.u32 [#allocation2], 4
      %s21 = int_to_ptr.vmem [resolvable:$true] %s20
      %26 = dma.hbm_to_vmem [thread:$0]  %s19, 512, %s21, [#allocation3], 256, 256, 16
    $region5: #{tpu_custom_call.1} parent=1 // pred_fallthru
      _
    // Predicated region
    $region6: #{tpu_custom_call.1} parent=1 // pred_check
      _
    $region7: #{tpu_custom_call.1} parent=1 // pred_check_branch
      %28 = sbr.rel (0) target = $region9
    $region8: #{tpu_custom_call.1} parent=1 // pred_region
      _
    $region9: #{tpu_custom_call.1} parent=1 // pred_fallthru
      _
    // Predicated region
    $region10: #{tpu_custom_call.1} parent=1 // pred_check
      _
    $region11: #{tpu_custom_call.1} parent=1 // pred_check_branch
      %30 = sbr.rel (0) target = $region13
    $region12: #{tpu_custom_call.1} parent=1 // pred_region
      _
    $region13: #{tpu_custom_call.1} parent=1 // pred_fallthru
      _
    // Predicated region
    $region14: #{tpu_custom_call.1} parent=1 // pred_check
      _
    $region15: #{tpu_custom_call.1} parent=1 // pred_check_branch
      %32 = sbr.rel (0) target = $region17
    $region16: #{tpu_custom_call.1} parent=1 // pred_region
      _
    $region17: #{tpu_custom_call.1} parent=1 // pred_fallthru
      _
    // Predicated region
    $region18: #{tpu_custom_call.1} parent=1 // pred_check
      _
    $region19: #{tpu_custom_call.1} parent=1 // pred_check_branch
      %34 = sbr.rel (0) target = $region21
    $region20: #{tpu_custom_call.1} parent=1 // pred_region
      _
    $region21: #{tpu_custom_call.1} parent=1 // pred_fallthru
      _
    // Predicated region
    $region22: #{tpu_custom_call.1} parent=1 // pred_check
      _
    $region23: #{tpu_custom_call.1} parent=1 // pred_check_branch
      %36 = sbr.rel (0) target = $region25
    $region24: #{tpu_custom_call.1} parent=1 // pred_region
      _
    $region25: #{tpu_custom_call.1} parent=1 // pred_fallthru
      _
    // Predicated region
    $region26: #{tpu_custom_call.1} parent=1 // pred_check
      _
    $region27: #{tpu_custom_call.1} parent=1 // pred_check_branch
      %38 = sbr.rel (0) target = $region29
    $region28: #{tpu_custom_call.1} parent=1 // pred_region
      _
    $region29: #{tpu_custom_call.1} parent=1 // pred_fallthru
      _
    // Predicated region
    $region30: #{tpu_custom_call.1} parent=1 // pred_check
      _
    $region31: #{tpu_custom_call.1} parent=1 // pred_check_branch
      %40 = sbr.rel (0) target = $region33
    $region32: #{tpu_custom_call.1} parent=1 // pred_region
      %42 = dma.done [#allocation3], 512
    $region33: #{tpu_custom_call.1} parent=1 // pred_fallthru
      _
    %v43 = vld [vmem:[#allocation2] sm:$0xff]
    %v44 = vld [vmem:[#allocation2 + $0x8] sm:$0xff]
    %v45 = vld [vmem:[#allocation2 + $0x10] sm:$0xff]
    %v46 = vld [vmem:[#allocation2 + $0x18] sm:$0xff]
    %v47 = vadd.f32 %v43, %v44
    %48 = vadd.xlane.f32.xlu0 %v47
    %v49 = vpop.xlane.xlu0 %48
    %v50 = vadd.f32 %v45, %v46
    %51 = vadd.xlane.f32.xlu0 %v50
    %v52 = vpop.xlane.xlu0 %51
    %v53 = vmul.f32 %v49, 0.00390625
    %v54 = vmul.f32 %v52, 0.00390625
    %v55 = vld [vmem:[%s1] sm:$0xff]
    %v58 = vlaneseq
    %v59 = vand.u32 %v58, 127
    %v60 = vperm.slane %v53, %v59
    %v61 = vperm.slane %v54, %v59
    %vm62 = vcmask 1041409
    %v63 = vsel %vm62, %v61, %v60
    %vm64 = vcmask 64512
    %v65 = vsel %vm64, %v63, 0
    %67 = vmatpush.msra.mxu0 0.0
    %68 = vmatpush.msra.mxu0 0.0
    %69 = vmatpush.msra.mxu0 0.0
    %70 = vmatpush.msra.mxu0 0.0
    %71 = vmatpush.msra.mxu0 0.0
    %72 = vmatpush.msra.mxu0 0.0
    %73 = vmatpush.msra.mxu0 0.0
    %74 = vmatpush.msra.mxu0 0.0
    %75 = vmatpush.msra.mxu0 0.0
    %76 = vmatpush.msra.mxu0 0.0
    %77 = vmatpush.msra.mxu0 0.0
    %78 = vmatpush.msra.mxu0 0.0
    %79 = vmatpush.msra.mxu0 0.0
    %80 = vmatpush.msra.mxu0 0.0
    %81 = vmatpush.msra.mxu0 0.0
    %82 = vmatpush.msra.mxu0 %v55
    %83 = vmatmul.f32.gmra.mxu0 %v65
    %v84 = vpop.f32.mrf.mxu0
    %v85 = vadd.f32 0.0, %v84
    %86 = vdwg.mxu0
    %v87 = vld [vmem:[%s2] sm:$0x1]
    %v89 = vperm.slane %v87, 0
    %v91 = vmul.f32 %v85, %v89
    %v92 = vld [vmem:[%s3] sm:$0x1]
    %v94 = vperm.slane %v92, 0
    %v96 = vadd.f32 %v91, %v94
    %v97 = vmax.f32 %v96, 0.0
    %v98 = vld [vmem:[%s4] sm:$0x3]
    %vm99 = vcmask 15360
    %v101 = vsel %vm99, %v97, 0
    %vm103 = vcmask 1041408
    %v105 = vsel %vm103, %v98, 0
    %107 = vmatpush.msra.mxu0 0.0
    %108 = vmatpush.msra.mxu0 0.0
    %109 = vmatpush.msra.mxu0 0.0
    %110 = vmatpush.msra.mxu0 0.0
    %111 = vmatpush.msra.mxu0 0.0
    %112 = vmatpush.msra.mxu0 0.0
    %113 = vmatpush.msra.mxu0 0.0
    %114 = vmatpush.msra.mxu0 0.0
    %115 = vmatpush.msra.mxu0 0.0
    %116 = vmatpush.msra.mxu0 0.0
    %117 = vmatpush.msra.mxu0 0.0
    %118 = vmatpush.msra.mxu0 0.0
    %119 = vmatpush.msra.mxu0 0.0
    %120 = vmatpush.msra.mxu0 0.0
    %121 = vmatpush.msra.mxu0 0.0
    %122 = vmatpush.msra.mxu0 %v105
    %123 = vmatmul.f32.gmra.mxu0 %v101
    %v124 = vpop.f32.mrf.mxu0
    %v125 = vadd.f32 0.0, %v124
    %126 = vdwg.mxu0
    %v127 = vld [vmem:[%s5] sm:$0x1]
    %v129 = vperm.slane %v127, 0
    %v131 = vmul.f32 %v125, %v129
    %v132 = vld [vmem:[%s6] sm:$0x1]
    %v134 = vperm.slane %v132, 0
    %v136 = vadd.f32 %v131, %v134
    %v137 = vadd.f32 %v136, 3.0
    %v138 = vmax.f32 %v137, 0.0
    %v139 = vmin.f32 %v138, 6.0
    %v140 = vmul.f32 %v139, 0.16666667
    %v141 = vperm.slane %v140, 0
    %v142 = vlaneseq
    %v143 = vshrl.u32 %v142, 7
    %145 = vset.pattern.permute.xlu0 %v143
    %146 = vperm.xlu0 %145, %v141
    %v147 = vpop.permute.xlu0 %146
    %v148 = vperm.slane %v140, 1
    %v149 = vlaneseq
    %v150 = vshrl.u32 %v149, 7
    %152 = vset.pattern.permute.xlu0 %v150
    %153 = vperm.xlu0 %152, %v148
    %v154 = vpop.permute.xlu0 %153
    %v155 = vmul.f32 %v43, %v147
    %v156 = vmul.f32 %v44, %v147
    %v157 = vmul.f32 %v45, %v154
    %v158 = vmul.f32 %v46, %v154
    %159 = vst [vmem:[#allocation5] sm:$0xff] %v155
    %160 = vst [vmem:[#allocation5 + $0x8] sm:$0xff] %v156
    %161 = vst [vmem:[#allocation5 + $0x10] sm:$0xff] %v157
    %162 = vst [vmem:[#allocation5 + $0x18] sm:$0xff] %v158
    // Predicated region
    $region34: #{tpu_custom_call.1} parent=1 // pred_check
      _
    $region35: #{tpu_custom_call.1} parent=1 // pred_check_branch
      %164 = sbr.rel (0) target = $region37
    $region36: #{tpu_custom_call.1} parent=1 // pred_region
      %166 = vsyncadd [#allocation4], 0
      %s167 = sshll.u32 [#allocation5], 4
      %s168 = int_to_ptr.vmem [resolvable:$true] %s167
      %s169 = sshll.u32 %s7, 4
      %s170 = int_to_ptr.hbm [resolvable:$true] %s169
      %175 = dma.vmem_to_hbm [thread:$0]  %s168, 512, %s170, [#allocation4], 256, 256, 16
    $region37: #{tpu_custom_call.1} parent=1 // pred_fallthru
      _
    // Predicated region
    $region38: #{tpu_custom_call.1} parent=1 // pred_check
      _
    $region39: #{tpu_custom_call.1} parent=1 // pred_check_branch
      %177 = sbr.rel (0) target = $region41
    $region40: #{tpu_custom_call.1} parent=1 // pred_region
      %179 = dma.done [#allocation4], 512
    $region41: #{tpu_custom_call.1} parent=1 // pred_fallthru
      _
    %180 = vsyncpa [#allocation3], 1
    %181 = vsyncpa [#allocation4], 1

</llo_original>
